<compile_context>
chip_gen: v7x
topology: tpu7x:2x2x1
jax: 0.10.0
libtpu: 0.0.40
codegen_flags: <defaults>
</compile_context>

<pallas_src>
import jax
import jax.numpy as jnp
from jax import lax
from jax.experimental import pallas as pl
from jax.experimental.pallas import tpu as pltpu

EPS = 1e-5
_LANE = 128


# ----------------------------- kernel body ---------------------------------
def _odefunc_kernel(x_ref, t1_ref, t2_ref, p_ref, gb_ref, out_ref, buf_ref):
    # x_ref:   (B, H, L)   B batch-planes, lane order = (batch-in-block, C, W)
    # t*_ref:  (3, L, L)   bf16 block-Toeplitz conv weights, one per ky
    # p_ref:   (L, L)      GroupNorm averaging projector (includes 1/count)
    # gb_ref:  (4, L)      [gamma1, beta1, gamma2, beta2] per-lane rows
    # out_ref: (B, H, L)
    # buf_ref: (B*(H+2), L) f32 row-padded scratch (per-plane H halos)
    B, H, L = out_ref.shape
    Hp = H + 2                 # per-plane row stride in the halo scratch
    M = B * Hp - 2             # rows covered by the three shifted matmuls

    # Stage the B input planes; only the two halo rows per plane are zeroed
    # each step, so every grid step is independent and the plane-block axis
    # can stay "parallel" (megacore / v7x dual-TC sharding).
    zrow = jnp.zeros((1, L), buf_ref.dtype)
    for b in range(B):
        base = b * Hp
        buf_ref[base:base + 1, :] = zrow
        buf_ref[base + 1:base + 1 + H, :] = x_ref[b]
        buf_ref[base + H + 1:base + H + 2, :] = zrow

    def conv3x3(t_ref):
        # One batched set of 3 row-shifted (M,L)x(L,L) matmuls covering all B
        # planes (the <=2 junk rows at each plane boundary are never read
        # back).  LHS is cast to bf16 to match the bf16 Toeplitz weights —
        # identical numerics to a DEFAULT-precision f32 dot, half the weight
        # VMEM/DMA.
        acc = jnp.zeros((M, L), jnp.float32)
        for dy in range(3):
            lhs = buf_ref[dy:dy + M, :].astype(jnp.bfloat16)
            acc = acc + jnp.dot(lhs, t_ref[dy],
                                preferred_element_type=jnp.float32)
        return acc

    def stack_rows(rows):
        return rows[0] if len(rows) == 1 else jnp.concatenate(rows, axis=0)

    def groupnorm_relu(acc, g_row, b_row, emit):
        # Centered two-pass GroupNorm: mean first, then E[(y-mean)^2].  Chosen
        # deliberately over the single stacked E[x^2]-E[x]^2 dot: it removes
        # the bf16/cancellation risk flagged in review, and the extra stats
        # matmul is only (B,L)x(L,L).
        sums = stack_rows([jnp.sum(acc[b * Hp:b * Hp + H], axis=0,
                                   keepdims=True) for b in range(B)])   # (B,L)
        mean = jnp.dot(sums, p_ref[...], preferred_element_type=jnp.float32)
        sqs = stack_rows([jnp.sum(jnp.square(acc[b * Hp:b * Hp + H]
                                             - mean[b:b + 1]),
                                  axis=0, keepdims=True)
                          for b in range(B)])                           # (B,L)
        var = jnp.dot(sqs, p_ref[...], preferred_element_type=jnp.float32)
        scale = lax.rsqrt(var + EPS) * g_row                            # (B,L)
        # Normalize + ReLU one plane at a time and emit immediately, so at
        # most one (H, L) f32 plane is live on top of `acc` (vreg pressure).
        for b in range(B):
            z = (acc[b * Hp:b * Hp + H] - mean[b:b + 1]) * scale[b:b + 1] + b_row
            emit(b, jnp.maximum(z, 0.0))

    g1_row, b1_row = gb_ref[0:1, :], gb_ref[1:2, :]
    g2_row, b2_row = gb_ref[2:3, :], gb_ref[3:4, :]

    # conv1 -> GN -> ReLU; result restaged straight into the halo scratch
    # (halo rows are untouched, so they stay zero for conv2).
    y1 = conv3x3(t1_ref)

    def restage(b, z):
        buf_ref[b * Hp + 1:b * Hp + 1 + H, :] = z.astype(buf_ref.dtype)

    groupnorm_relu(y1, g1_row, b1_row, restage)

    # conv2 -> GN -> ReLU -> output
    y2 = conv3x3(t2_ref)

    def write_out(b, z):
        out_ref[b] = z.astype(out_ref.dtype)

    groupnorm_relu(y2, g2_row, b2_row, write_out)


# --------------------------- one-time host prep -----------------------------
def _build_toeplitz(w_hwio, nb, C, W):
    """(3, L, L) block-Toeplitz matrices T[ky, (b,ci,w_in), (b,co,w_out)] that
    fold the (kx, ci)->co contraction and the W-boundary zero padding.
    Stored in bf16: DEFAULT-precision MXU truncates to bf16 anyway; this
    halves the dominant resident VMEM and HBM->VMEM DMA."""
    L = nb * C * W
    l = jnp.arange(L)
    b_idx = l // (C * W)
    c_idx = (l // W) % C
    w_idx = l % W
    dxm = w_idx[:, None] - w_idx[None, :] + 1              # kernel-width tap
    valid = (b_idx[:, None] == b_idx[None, :]) & (dxm >= 0) & (dxm <= 2)
    dx_c = jnp.clip(dxm, 0, 2)
    vals = w_hwio[:, dx_c, c_idx[:, None], c_idx[None, :]]  # (3, L, L)
    return jnp.where(valid[None], vals, 0.0).astype(jnp.bfloat16)


def _build_projector(nb, C, W, H, G):
    """(L, L) matrix: 1/(H*W*cg) where (batch, group) of row and column match."""
    L = nb * C * W
    cg = C // G
    l = jnp.arange(L)
    b_idx = l // (C * W)
    g_idx = ((l // W) % C) // cg
    same = (b_idx[:, None] == b_idx[None, :]) & (g_idx[:, None] == g_idx[None, :])
    return same.astype(jnp.float32) / float(H * W * cg)


def _lane_row(v, nb, C, W):
    """(C,) per-channel vector -> (1, nb*C*W) per-lane row."""
    return jnp.broadcast_to(v.astype(jnp.float32)[None, :, None],
                            (nb, C, W)).reshape(1, nb * C * W)


def _pick_plane_block(nblk, H, row_target=512):
    """Largest divisor of nblk with conv-matmul M = d*(H+2) <= row_target,
    preferring >= 2 grid steps so the 'parallel' axis can shard across
    TensorCores (v7x has 2 TCs per chip)."""
    fits = [d for d in range(1, nblk + 1)
            if nblk % d == 0 and d * (H + 2) <= row_target]
    if not fits:
        return 1
    best = max(fits)
    if nblk >= 2 and nblk // best < 2:
        two_step = [d for d in fits if nblk // d >= 2]
        if two_step:
            best = max(two_step)
    return best


def _vmem_limit_bytes(B_BLK, H, L):
    Hp = H + 2
    block_io = B_BLK * H * L * 4 * 2                 # in + out planes (f32)
    weights = 2 * 3 * L * L * 2 + L * L * 4 + 4 * L * 4
    scratch = B_BLK * Hp * L * 4
    temps = 4 * B_BLK * Hp * L * 4                   # conv acc + relayouts
    est = 2 * (block_io + weights) + scratch + temps  # x2: double buffering
    # TODO(synk): for L >= ~1024 the resident (L,L) operands no longer fit
    # v7x's 64 MiB VMEM — tile W (block-banded Toeplitz) instead of full (L,L).
    return int(min(64 * 2 ** 20, max(2 * est, 16 * 2 ** 20)))


def make_odefunc_tisode(params, x_shape, *, lane_multiple=_LANE, row_target=512):
    """One-time prep for ODEfunc_tisode.

    Builds the bf16 block-Toeplitz conv operands, the GroupNorm projector,
    the per-lane affine rows and the pallas_call, and returns a jitted
    forward(t, x).  Call this ONCE per ODE solve — the per-call closure only
    does the cheap NCHW <-> (plane, H, L) layout plumbing.
    """
    w1, g1, b1, w2, g2, b2 = params
    N, C, H, W = x_shape
    G = min(32, C)
    assert C % G == 0, "GroupNorm requires C % num_groups == 0"

    per = C * W
    # Fold batch elements into the lane axis so L = nb*C*W is lane-dense
    # (multiple of 128 -> unmasked full-width vector stores).
    # TODO(synk): on v6e/v7x pass lane_multiple=256 (2x256^2 MXU); when C*W is
    # not a divisor/multiple of 128, zero-pad W instead of accepting ragged L.
    nb = 1 if per >= lane_multiple else -(-lane_multiple // per)
    L = nb * per
    Npad = -(-N // nb) * nb            # zero-pad batch instead of shrinking nb
    nblk = Npad // nb
    B_BLK = _pick_plane_block(nblk, H, row_target)
    Hp = H + 2

    T1 = _build_toeplitz(w1.astype(jnp.float32), nb, C, W)
    T2 = _build_toeplitz(w2.astype(jnp.float32), nb, C, W)
    P = _build_projector(nb, C, W, H, G)
    gb = jnp.concatenate([_lane_row(g1, nb, C, W), _lane_row(b1, nb, C, W),
                          _lane_row(g2, nb, C, W), _lane_row(b2, nb, C, W)], 0)

    # NOTE: the constant-index operands (T1/T2/P/gb) are still double-buffered
    # by the default pipeline; switching them to pipeline_mode=pl.Buffered(1)
    # would halve their resident VMEM (matters for large L on v7x) once
    # single-buffering is validated on the deployed jax version.
    call = pl.pallas_call(
        _odefunc_kernel,
        out_shape=jax.ShapeDtypeStruct((nblk, H, L), jnp.float32),
        grid=(nblk // B_BLK,),
        in_specs=[
            pl.BlockSpec((B_BLK, H, L), lambda i: (i, 0, 0)),
            pl.BlockSpec((3, L, L), lambda i: (0, 0, 0)),
            pl.BlockSpec((3, L, L), lambda i: (0, 0, 0)),
            pl.BlockSpec((L, L), lambda i: (0, 0)),
            pl.BlockSpec((4, L), lambda i: (0, 0)),
        ],
        out_specs=pl.BlockSpec((B_BLK, H, L), lambda i: (i, 0, 0)),
        scratch_shapes=[pltpu.VMEM((B_BLK * Hp, L), jnp.float32)],
        compiler_params=pltpu.CompilerParams(
            dimension_semantics=("parallel",),
            vmem_limit_bytes=_vmem_limit_bytes(B_BLK, H, L)),
    )

    def forward(t, x):
        del t                                # matches PyTorch: t is unused
        xf = x.astype(jnp.float32)
        if Npad != N:
            xf = jnp.pad(xf, ((0, Npad - N), (0, 0), (0, 0), (0, 0)))
        xp = (xf.reshape(nblk, nb, C, H, W)
                .transpose(0, 3, 1, 2, 4)
                .reshape(nblk, H, L))
        out = call(xp, T1, T2, P, gb)
        out = (out.reshape(nblk, H, nb, C, W)
                  .transpose(0, 2, 3, 1, 4)
                  .reshape(Npad, C, H, W))
        return out[:N]

    return jax.jit(forward)


def odefunc_tisode_forward(t, x, params):
    """One-off convenience wrapper (rebuilds the prep every call; prefer
    make_odefunc_tisode for repeated RHS evaluations in an ODE solve)."""
    return make_odefunc_tisode(params, x.shape)(t, x)


# ---------------- pure-JAX reference (for correctness check) ----------------
def _ref_groupnorm(x_nchw, gamma, beta, G, eps=EPS):
    N, C, H, W = x_nchw.shape
    cg = C // G
    xr = x_nchw.reshape(N, G, cg, H, W)
    mean = xr.mean(axis=(2, 3, 4), keepdims=True)
    var = ((xr - mean) ** 2).mean(axis=(2, 3, 4), keepdims=True)
    xn = ((xr - mean) / jnp.sqrt(var + eps)).reshape(N, C, H, W)
    return xn * gamma[None, :, None, None] + beta[None, :, None, None]


def _ref_forward(t, x_nchw, params):
    del t
    w1, g1, b1, w2, g2, b2 = params
    C = x_nchw.shape[1]
    G = min(32, C)
    dn = ('NCHW', 'HWIO', 'NCHW')
    y = lax.conv_general_dilated(x_nchw.astype(jnp.float32), w1, (1, 1), 'SAME',
                                 dimension_numbers=dn)
    y = jnp.maximum(_ref_groupnorm(y, g1, b1, G), 0.0)
    y = lax.conv_general_dilated(y, w2, (1, 1), 'SAME', dimension_numbers=dn)
    y = jnp.maximum(_ref_groupnorm(y, g2, b2, G), 0.0)
    return y


if __name__ == "__main__":
    key = jax.random.PRNGKey(0)
    N, dim, H, W = 2, 4, 16, 16

    k = jax.random.split(key, 7)
    x = jax.random.normal(k[0], (N, dim, H, W), jnp.float32)      # NCHW input
    t = jnp.float32(0.5)                                          # unused

    # Conv weights in HWIO (3,3,Cin,Cout); GroupNorm gamma/beta (C,)
    w1 = 0.1 * jax.random.normal(k[1], (3, 3, dim, dim), jnp.float32)
    w2 = 0.1 * jax.random.normal(k[2], (3, 3, dim, dim), jnp.float32)
    g1 = 1.0 + 0.1 * jax.random.normal(k[3], (dim,), jnp.float32)
    b1 = 0.1 * jax.random.normal(k[4], (dim,), jnp.float32)
    g2 = 1.0 + 0.1 * jax.random.normal(k[5], (dim,), jnp.float32)
    b2 = 0.1 * jax.random.normal(k[6], (dim,), jnp.float32)
    params = (w1, g1, b1, w2, g2, b2)

    # One-time prep (hoisted out of the per-call RHS, per review), then call.
    odefunc = make_odefunc_tisode(params, x.shape)
    out = jax.block_until_ready(odefunc(t, x))
    ref = jax.block_until_ready(_ref_forward(t, x, params))

    assert out.shape == (N, dim, H, W)
    err = float(jnp.max(jnp.abs(out - ref)))
    # Tolerance reflects single-pass bf16 MXU rounding at DEFAULT precision
    # (structural errors would be >10x larger).
    assert jnp.allclose(out, ref, atol=5e-2, rtol=5e-2), f"max abs diff {err}"

    print("KERNEL_OK")
</pallas_src>

<mosaic_0001>
module attributes {stable_mosaic.version = 11 : i64} {
  func.func @_odefunc_kernel(%arg0: i32, %arg1: memref<1x16x128xf32, #tpu.memory_space<vmem>>, %arg2: memref<3x128x128xbf16, #tpu.memory_space<vmem>>, %arg3: memref<3x128x128xbf16, #tpu.memory_space<vmem>>, %arg4: memref<128x128xf32, #tpu.memory_space<vmem>>, %arg5: memref<4x128xf32, #tpu.memory_space<vmem>>, %arg6: memref<1x16x128xf32, #tpu.memory_space<vmem>>, %arg7: memref<18x128xf32, #tpu.memory_space<vmem>>) attributes {dimension_semantics = [#tpu.dimension_semantics<parallel>], iteration_bounds = array<i64: 1>, scalar_prefetch = 0 : i64, scratch_operands = 1 : i64, tpu.core_type = #tpu.core_type<tc>, window_params = [{transform_indices = @transform_0, window_bounds = array<i64: 1, 16, 128>}, {pipeline_mode = #tpu.pipeline_mode<synchronous>, transform_indices = @transform_1, window_bounds = array<i64: 3, 128, 128>}, {pipeline_mode = #tpu.pipeline_mode<synchronous>, transform_indices = @transform_2, window_bounds = array<i64: 3, 128, 128>}, {pipeline_mode = #tpu.pipeline_mode<synchronous>, transform_indices = @transform_3, window_bounds = array<i64: 128, 128>}, {pipeline_mode = #tpu.pipeline_mode<synchronous>, transform_indices = @transform_4, window_bounds = array<i64: 4, 128>}, {transform_indices = @transform_5, window_bounds = array<i64: 1, 16, 128>}]} {
    %cst = arith.constant 0.000000e+00 : f32
    %0 = vector.broadcast %cst : f32 to vector<1x128xf32>
    %c0 = arith.constant 0 : index
    %c0_0 = arith.constant 0 : index
    %1 = vector.load %arg7[%c0, %c0_0] : memref<18x128xf32, #tpu.memory_space<vmem>>, vector<1x128xf32>
    tpu.vector_store %arg7[%c0, %c0_0], %0 {strides = array<i32>} : memref<18x128xf32, #tpu.memory_space<vmem>>, vector<1x128xf32>,
    %c0_1 = arith.constant 0 : index
    %c0_2 = arith.constant 0 : index
    %c0_3 = arith.constant 0 : index
    %2 = vector.load %arg1[%c0_1, %c0_2, %c0_3] : memref<1x16x128xf32, #tpu.memory_space<vmem>>, vector<1x16x128xf32>
    %3 = vector.shape_cast %2 : vector<1x16x128xf32> to vector<16x128xf32>
    %c1 = arith.constant 1 : index
    %c0_4 = arith.constant 0 : index
    %4 = vector.load %arg7[%c1, %c0_4] : memref<18x128xf32, #tpu.memory_space<vmem>>, vector<16x128xf32>
    tpu.vector_store %arg7[%c1, %c0_4], %3 {strides = array<i32>} : memref<18x128xf32, #tpu.memory_space<vmem>>, vector<16x128xf32>,
    %c17 = arith.constant 17 : index
    %c0_5 = arith.constant 0 : index
    %5 = vector.load %arg7[%c17, %c0_5] : memref<18x128xf32, #tpu.memory_space<vmem>>, vector<1x128xf32>
    tpu.vector_store %arg7[%c17, %c0_5], %0 {strides = array<i32>} : memref<18x128xf32, #tpu.memory_space<vmem>>, vector<1x128xf32>,
    %c0_6 = arith.constant 0 : index
    %c0_7 = arith.constant 0 : index
    %6 = vector.load %arg5[%c0_6, %c0_7] : memref<4x128xf32, #tpu.memory_space<vmem>>, vector<1x128xf32>
    %c1_8 = arith.constant 1 : index
    %c0_9 = arith.constant 0 : index
    %7 = vector.load %arg5[%c1_8, %c0_9] : memref<4x128xf32, #tpu.memory_space<vmem>>, vector<1x128xf32>
    %c2 = arith.constant 2 : index
    %c0_10 = arith.constant 0 : index
    %8 = vector.load %arg5[%c2, %c0_10] : memref<4x128xf32, #tpu.memory_space<vmem>>, vector<1x128xf32>
    %c3 = arith.constant 3 : index
    %c0_11 = arith.constant 0 : index
    %9 = vector.load %arg5[%c3, %c0_11] : memref<4x128xf32, #tpu.memory_space<vmem>>, vector<1x128xf32>
    %cst_12 = arith.constant 0.000000e+00 : f32
    %10 = vector.broadcast %cst_12 : f32 to vector<16x128xf32>
    %c0_13 = arith.constant 0 : index
    %c0_14 = arith.constant 0 : index
    %11 = vector.load %arg7[%c0_13, %c0_14] : memref<18x128xf32, #tpu.memory_space<vmem>>, vector<16x128xf32>
    %12 = arith.truncf %11 : vector<16x128xf32> to vector<16x128xbf16>
    %c0_15 = arith.constant 0 : index
    %c0_16 = arith.constant 0 : index
    %c0_17 = arith.constant 0 : index
    %13 = vector.load %arg2[%c0_15, %c0_16, %c0_17] : memref<3x128x128xbf16, #tpu.memory_space<vmem>>, vector<1x128x128xbf16>
    %14 = vector.shape_cast %13 : vector<1x128x128xbf16> to vector<128x128xbf16>
    %cst_18 = arith.constant dense<0.000000e+00> : vector<16x128xf32>
    %15 = tpu.matmul %12, %14, %cst_18 {dimension_numbers = #tpu.dot_dimension_numbers<[1], [0], [0], [1], [0, 0, 1, 1], [], []>} : vector<16x128xbf16>, vector<128x128xbf16>, vector<16x128xf32> -> vector<16x128xf32>
    %16 = arith.addf %10, %15 : vector<16x128xf32>
    %c1_19 = arith.constant 1 : index
    %c0_20 = arith.constant 0 : index
    %17 = vector.load %arg7[%c1_19, %c0_20] : memref<18x128xf32, #tpu.memory_space<vmem>>, vector<16x128xf32>
    %18 = arith.truncf %17 : vector<16x128xf32> to vector<16x128xbf16>
    %c1_21 = arith.constant 1 : index
    %c0_22 = arith.constant 0 : index
    %c0_23 = arith.constant 0 : index
    %19 = vector.load %arg2[%c1_21, %c0_22, %c0_23] : memref<3x128x128xbf16, #tpu.memory_space<vmem>>, vector<1x128x128xbf16>
    %20 = vector.shape_cast %19 : vector<1x128x128xbf16> to vector<128x128xbf16>
    %cst_24 = arith.constant dense<0.000000e+00> : vector<16x128xf32>
    %21 = tpu.matmul %18, %20, %cst_24 {dimension_numbers = #tpu.dot_dimension_numbers<[1], [0], [0], [1], [0, 0, 1, 1], [], []>} : vector<16x128xbf16>, vector<128x128xbf16>, vector<16x128xf32> -> vector<16x128xf32>
    %22 = arith.addf %16, %21 : vector<16x128xf32>
    %c2_25 = arith.constant 2 : index
    %c0_26 = arith.constant 0 : index
    %23 = vector.load %arg7[%c2_25, %c0_26] : memref<18x128xf32, #tpu.memory_space<vmem>>, vector<16x128xf32>
    %24 = arith.truncf %23 : vector<16x128xf32> to vector<16x128xbf16>
    %c2_27 = arith.constant 2 : index
    %c0_28 = arith.constant 0 : index
    %c0_29 = arith.constant 0 : index
    %25 = vector.load %arg2[%c2_27, %c0_28, %c0_29] : memref<3x128x128xbf16, #tpu.memory_space<vmem>>, vector<1x128x128xbf16>
    %26 = vector.shape_cast %25 : vector<1x128x128xbf16> to vector<128x128xbf16>
    %cst_30 = arith.constant dense<0.000000e+00> : vector<16x128xf32>
    %27 = tpu.matmul %24, %26, %cst_30 {dimension_numbers = #tpu.dot_dimension_numbers<[1], [0], [0], [1], [0, 0, 1, 1], [], []>} : vector<16x128xbf16>, vector<128x128xbf16>, vector<16x128xf32> -> vector<16x128xf32>
    %28 = arith.addf %22, %27 : vector<16x128xf32>
    %cst_31 = arith.constant dense<0.000000e+00> : vector<128xf32>
    %29 = vector.multi_reduction <add>, %28, %cst_31 [0] : vector<16x128xf32> to vector<128xf32>
    %30 = vector.shape_cast %29 : vector<128xf32> to vector<1x128xf32>
    %c0_32 = arith.constant 0 : index
    %c0_33 = arith.constant 0 : index
    %31 = vector.load %arg4[%c0_32, %c0_33] : memref<128x128xf32, #tpu.memory_space<vmem>>, vector<128x128xf32>
    %cst_34 = arith.constant dense<0.000000e+00> : vector<1x128xf32>
    %32 = tpu.matmul %30, %31, %cst_34 {dimension_numbers = #tpu.dot_dimension_numbers<[1], [0], [0], [1], [0, 0, 1, 1], [], []>} : vector<1x128xf32>, vector<128x128xf32>, vector<1x128xf32> -> vector<1x128xf32>
    %33 = vector.broadcast %32 : vector<1x128xf32> to vector<16x128xf32>
    %34 = arith.subf %28, %33 : vector<16x128xf32>
    %35 = arith.mulf %34, %34 : vector<16x128xf32>
    %cst_35 = arith.constant dense<0.000000e+00> : vector<128xf32>
    %36 = vector.multi_reduction <add>, %35, %cst_35 [0] : vector<16x128xf32> to vector<128xf32>
    %37 = vector.shape_cast %36 : vector<128xf32> to vector<1x128xf32>
    %c0_36 = arith.constant 0 : index
    %c0_37 = arith.constant 0 : index
    %38 = vector.load %arg4[%c0_36, %c0_37] : memref<128x128xf32, #tpu.memory_space<vmem>>, vector<128x128xf32>
    %cst_38 = arith.constant dense<0.000000e+00> : vector<1x128xf32>
    %39 = tpu.matmul %37, %38, %cst_38 {dimension_numbers = #tpu.dot_dimension_numbers<[1], [0], [0], [1], [0, 0, 1, 1], [], []>} : vector<1x128xf32>, vector<128x128xf32>, vector<1x128xf32> -> vector<1x128xf32>
    %cst_39 = arith.constant 9.99999974E-6 : f32
    %40 = vector.broadcast %cst_39 : f32 to vector<1x128xf32>
    %41 = arith.addf %39, %40 : vector<1x128xf32>
    %42 = math.rsqrt %41 : vector<1x128xf32>
    %43 = arith.mulf %42, %6 : vector<1x128xf32>
    %44 = vector.broadcast %32 : vector<1x128xf32> to vector<16x128xf32>
    %45 = arith.subf %28, %44 : vector<16x128xf32>
    %46 = vector.broadcast %43 : vector<1x128xf32> to vector<16x128xf32>
    %47 = arith.mulf %45, %46 : vector<16x128xf32>
    %48 = vector.broadcast %7 : vector<1x128xf32> to vector<16x128xf32>
    %49 = arith.addf %47, %48 : vector<16x128xf32>
    %cst_40 = arith.constant 0.000000e+00 : f32
    %50 = vector.broadcast %cst_40 : f32 to vector<16x128xf32>
    %51 = arith.maximumf %49, %50 : vector<16x128xf32>
    %c1_41 = arith.constant 1 : index
    %c0_42 = arith.constant 0 : index
    %52 = vector.load %arg7[%c1_41, %c0_42] : memref<18x128xf32, #tpu.memory_space<vmem>>, vector<16x128xf32>
    tpu.vector_store %arg7[%c1_41, %c0_42], %51 {strides = array<i32>} : memref<18x128xf32, #tpu.memory_space<vmem>>, vector<16x128xf32>,
    %cst_43 = arith.constant 0.000000e+00 : f32
    %53 = vector.broadcast %cst_43 : f32 to vector<16x128xf32>
    %c0_44 = arith.constant 0 : index
    %c0_45 = arith.constant 0 : index
    %54 = vector.load %arg7[%c0_44, %c0_45] : memref<18x128xf32, #tpu.memory_space<vmem>>, vector<16x128xf32>
    %55 = arith.truncf %54 : vector<16x128xf32> to vector<16x128xbf16>
    %c0_46 = arith.constant 0 : index
    %c0_47 = arith.constant 0 : index
    %c0_48 = arith.constant 0 : index
    %56 = vector.load %arg3[%c0_46, %c0_47, %c0_48] : memref<3x128x128xbf16, #tpu.memory_space<vmem>>, vector<1x128x128xbf16>
    %57 = vector.shape_cast %56 : vector<1x128x128xbf16> to vector<128x128xbf16>
    %cst_49 = arith.constant dense<0.000000e+00> : vector<16x128xf32>
    %58 = tpu.matmul %55, %57, %cst_49 {dimension_numbers = #tpu.dot_dimension_numbers<[1], [0], [0], [1], [0, 0, 1, 1], [], []>} : vector<16x128xbf16>, vector<128x128xbf16>, vector<16x128xf32> -> vector<16x128xf32>
    %59 = arith.addf %53, %58 : vector<16x128xf32>
    %c1_50 = arith.constant 1 : index
    %c0_51 = arith.constant 0 : index
    %60 = vector.load %arg7[%c1_50, %c0_51] : memref<18x128xf32, #tpu.memory_space<vmem>>, vector<16x128xf32>
    %61 = arith.truncf %60 : vector<16x128xf32> to vector<16x128xbf16>
    %c1_52 = arith.constant 1 : index
    %c0_53 = arith.constant 0 : index
    %c0_54 = arith.constant 0 : index
    %62 = vector.load %arg3[%c1_52, %c0_53, %c0_54] : memref<3x128x128xbf16, #tpu.memory_space<vmem>>, vector<1x128x128xbf16>
    %63 = vector.shape_cast %62 : vector<1x128x128xbf16> to vector<128x128xbf16>
    %cst_55 = arith.constant dense<0.000000e+00> : vector<16x128xf32>
    %64 = tpu.matmul %61, %63, %cst_55 {dimension_numbers = #tpu.dot_dimension_numbers<[1], [0], [0], [1], [0, 0, 1, 1], [], []>} : vector<16x128xbf16>, vector<128x128xbf16>, vector<16x128xf32> -> vector<16x128xf32>
    %65 = arith.addf %59, %64 : vector<16x128xf32>
    %c2_56 = arith.constant 2 : index
    %c0_57 = arith.constant 0 : index
    %66 = vector.load %arg7[%c2_56, %c0_57] : memref<18x128xf32, #tpu.memory_space<vmem>>, vector<16x128xf32>
    %67 = arith.truncf %66 : vector<16x128xf32> to vector<16x128xbf16>
    %c2_58 = arith.constant 2 : index
    %c0_59 = arith.constant 0 : index
    %c0_60 = arith.constant 0 : index
    %68 = vector.load %arg3[%c2_58, %c0_59, %c0_60] : memref<3x128x128xbf16, #tpu.memory_space<vmem>>, vector<1x128x128xbf16>
    %69 = vector.shape_cast %68 : vector<1x128x128xbf16> to vector<128x128xbf16>
    %cst_61 = arith.constant dense<0.000000e+00> : vector<16x128xf32>
    %70 = tpu.matmul %67, %69, %cst_61 {dimension_numbers = #tpu.dot_dimension_numbers<[1], [0], [0], [1], [0, 0, 1, 1], [], []>} : vector<16x128xbf16>, vector<128x128xbf16>, vector<16x128xf32> -> vector<16x128xf32>
    %71 = arith.addf %65, %70 : vector<16x128xf32>
    %cst_62 = arith.constant dense<0.000000e+00> : vector<128xf32>
    %72 = vector.multi_reduction <add>, %71, %cst_62 [0] : vector<16x128xf32> to vector<128xf32>
    %73 = vector.shape_cast %72 : vector<128xf32> to vector<1x128xf32>
    %c0_63 = arith.constant 0 : index
    %c0_64 = arith.constant 0 : index
    %74 = vector.load %arg4[%c0_63, %c0_64] : memref<128x128xf32, #tpu.memory_space<vmem>>, vector<128x128xf32>
    %cst_65 = arith.constant dense<0.000000e+00> : vector<1x128xf32>
    %75 = tpu.matmul %73, %74, %cst_65 {dimension_numbers = #tpu.dot_dimension_numbers<[1], [0], [0], [1], [0, 0, 1, 1], [], []>} : vector<1x128xf32>, vector<128x128xf32>, vector<1x128xf32> -> vector<1x128xf32>
    %76 = vector.broadcast %75 : vector<1x128xf32> to vector<16x128xf32>
    %77 = arith.subf %71, %76 : vector<16x128xf32>
    %78 = arith.mulf %77, %77 : vector<16x128xf32>
    %cst_66 = arith.constant dense<0.000000e+00> : vector<128xf32>
    %79 = vector.multi_reduction <add>, %78, %cst_66 [0] : vector<16x128xf32> to vector<128xf32>
    %80 = vector.shape_cast %79 : vector<128xf32> to vector<1x128xf32>
    %c0_67 = arith.constant 0 : index
    %c0_68 = arith.constant 0 : index
    %81 = vector.load %arg4[%c0_67, %c0_68] : memref<128x128xf32, #tpu.memory_space<vmem>>, vector<128x128xf32>
    %cst_69 = arith.constant dense<0.000000e+00> : vector<1x128xf32>
    %82 = tpu.matmul %80, %81, %cst_69 {dimension_numbers = #tpu.dot_dimension_numbers<[1], [0], [0], [1], [0, 0, 1, 1], [], []>} : vector<1x128xf32>, vector<128x128xf32>, vector<1x128xf32> -> vector<1x128xf32>
    %cst_70 = arith.constant 9.99999974E-6 : f32
    %83 = vector.broadcast %cst_70 : f32 to vector<1x128xf32>
    %84 = arith.addf %82, %83 : vector<1x128xf32>
    %85 = math.rsqrt %84 : vector<1x128xf32>
    %86 = arith.mulf %85, %8 : vector<1x128xf32>
    %87 = vector.broadcast %75 : vector<1x128xf32> to vector<16x128xf32>
    %88 = arith.subf %71, %87 : vector<16x128xf32>
    %89 = vector.broadcast %86 : vector<1x128xf32> to vector<16x128xf32>
    %90 = arith.mulf %88, %89 : vector<16x128xf32>
    %91 = vector.broadcast %9 : vector<1x128xf32> to vector<16x128xf32>
    %92 = arith.addf %90, %91 : vector<16x128xf32>
    %cst_71 = arith.constant 0.000000e+00 : f32
    %93 = vector.broadcast %cst_71 : f32 to vector<16x128xf32>
    %94 = arith.maximumf %92, %93 : vector<16x128xf32>
    %c0_72 = arith.constant 0 : index
    %c0_73 = arith.constant 0 : index
    %c0_74 = arith.constant 0 : index
    %95 = vector.load %arg6[%c0_72, %c0_73, %c0_74] : memref<1x16x128xf32, #tpu.memory_space<vmem>>, vector<1x16x128xf32>
    %96 = vector.shape_cast %95 : vector<1x16x128xf32> to vector<16x128xf32>
    %97 = vector.shape_cast %94 : vector<16x128xf32> to vector<1x16x128xf32>
    tpu.vector_store %arg6[%c0_72, %c0_73, %c0_74], %97 {strides = array<i32>} : memref<1x16x128xf32, #tpu.memory_space<vmem>>, vector<1x16x128xf32>,
    return
  }
  func.func @transform_0(%arg0: i32) -> (i32, i32, i32) {
    %c0_i32 = arith.constant 0 : i32
    %c0_i32_0 = arith.constant 0 : i32
    %c0_i32_1 = arith.constant 0 : i32
    return %arg0, %c0_i32, %c0_i32_0 : i32, i32, i32
  }
  func.func @transform_1(%arg0: i32) -> (i32, i32, i32) {
    %c0_i32 = arith.constant 0 : i32
    %c0_i32_0 = arith.constant 0 : i32
    %c0_i32_1 = arith.constant 0 : i32
    %c0_i32_2 = arith.constant 0 : i32
    return %c0_i32, %c0_i32_0, %c0_i32_1 : i32, i32, i32
  }
  func.func @transform_2(%arg0: i32) -> (i32, i32, i32) {
    %c0_i32 = arith.constant 0 : i32
    %c0_i32_0 = arith.constant 0 : i32
    %c0_i32_1 = arith.constant 0 : i32
    %c0_i32_2 = arith.constant 0 : i32
    return %c0_i32, %c0_i32_0, %c0_i32_1 : i32, i32, i32
  }
  func.func @transform_3(%arg0: i32) -> (i32, i32) {
    %c0_i32 = arith.constant 0 : i32
    %c0_i32_0 = arith.constant 0 : i32
    %c0_i32_1 = arith.constant 0 : i32
    return %c0_i32, %c0_i32_0 : i32, i32
  }
  func.func @transform_4(%arg0: i32) -> (i32, i32) {
    %c0_i32 = arith.constant 0 : i32
    %c0_i32_0 = arith.constant 0 : i32
    %c0_i32_1 = arith.constant 0 : i32
    return %c0_i32, %c0_i32_0 : i32, i32
  }
  func.func @transform_5(%arg0: i32) -> (i32, i32, i32) {
    %c0_i32 = arith.constant 0 : i32
    %c0_i32_0 = arith.constant 0 : i32
    %c0_i32_1 = arith.constant 0 : i32
    return %arg0, %c0_i32, %c0_i32_0 : i32, i32, i32
  }
}

</mosaic_0001>

<llo_original>
// kernel: forward.1
$region0: #{forward.1}
  #allocation0 [shape = 'u32[]', space=smem, size = 0x4, offset = 0x4, fixed_abs, tag = 'smem constant byte address 0x4 - core index']
  #allocation1 [shape = 'u32[144,128]{1,0:T(1,128)}', space=vmem, size = 0x12000, scoped, tag = 'internal scratch']
  #allocation2 [shape = 'f32[18,128]{1,0:T(8,128)}', space=vmem, size = 0x3000, scoped, tag = 'scratch operand']
  %s0 = inlined_call_operand.vmem [shape: f32[1,16,128], index: 0, kind: input, shape index: {}]
  %s1 = inlined_call_operand.vmem [shape: bf16[3,128,128], index: 1, kind: input, shape index: {}]
  %s2 = inlined_call_operand.vmem [shape: bf16[3,128,128], index: 2, kind: input, shape index: {}]
  %s3 = inlined_call_operand.hbm [shape: f32[128,128], index: 3, kind: input, shape index: {}]
  %s4 = inlined_call_operand.vmem [shape: f32[4,128], index: 4, kind: input, shape index: {}]
  %s5 = inlined_call_operand.vmem [shape: f32[1,16,128], index: 5, kind: output, shape index: {}]
  %s6 = sld [smem:[#allocation0]]
  $region34: #{forward.1} parent=0
    _
  %s8 = ssub.s32 1, %s6
  %s9 = scalar_select 0, %s8, %s6
  $region1: #{forward.1} parent=0
    #allocation3 [shape = 'u8[65536]{0}', space=vmem, size = 0x10000, scoped, tag = 'input window, operand 3, single buffered']
    #allocation4 [shape = 's32[1]{0}', space=sflag, size = 0x4, scoped, tag = 'scoped memory for forward.1']
    %10 = vsyncpa [#allocation4], 0
    // Predicated region
    $region2: #{forward.1} parent=1 // pred_check
      _
    $region3: #{forward.1} parent=1 // pred_check_branch
      %12 = sbr.rel (0) target = $region5
    $region4: #{forward.1} parent=1 // pred_region
      _
    $region5: #{forward.1} parent=1 // pred_fallthru
      _
    // Predicated region
    $region6: #{forward.1} parent=1 // pred_check
      _
    $region7: #{forward.1} parent=1 // pred_check_branch
      %14 = sbr.rel (0) target = $region9
    $region8: #{forward.1} parent=1 // pred_region
      _
    $region9: #{forward.1} parent=1 // pred_fallthru
      _
    // Predicated region
    $region10: #{forward.1} parent=1 // pred_check
      _
    $region11: #{forward.1} parent=1 // pred_check_branch
      %16 = sbr.rel (0) target = $region13
    $region12: #{forward.1} parent=1 // pred_region
      _
    $region13: #{forward.1} parent=1 // pred_fallthru
      _
    // Predicated region
    $region14: #{forward.1} parent=1 // pred_check
      _
    $region15: #{forward.1} parent=1 // pred_check_branch
      %18 = sbr.rel (0) target = $region17
    $region16: #{forward.1} parent=1 // pred_region
      %s20 = ssub.s32 2048, 2048
      %21 = vsyncadd [#allocation4], %s20
      %s22 = sshll.u32 [#allocation3], 4
      %s23 = int_to_ptr.vmem [resolvable:$true] %s22
      %28 = dma.hbm_to_vmem [thread:$0]  %s3, 2048, %s23, [#allocation4], 128, 128, 8
    $region17: #{forward.1} parent=1 // pred_fallthru
      _
    // Predicated region
    $region18: #{forward.1} parent=1 // pred_check
      _
    $region19: #{forward.1} parent=1 // pred_check_branch
      %30 = sbr.rel (0) target = $region21
    $region20: #{forward.1} parent=1 // pred_region
      _
    $region21: #{forward.1} parent=1 // pred_fallthru
      _
    // Predicated region
    $region22: #{forward.1} parent=1 // pred_check
      _
    $region23: #{forward.1} parent=1 // pred_check_branch
      %32 = sbr.rel (0) target = $region25
    $region24: #{forward.1} parent=1 // pred_region
      %33 = dma.done [#allocation4], 2048
    $region25: #{forward.1} parent=1 // pred_fallthru
      _
    %35 = vst [vmem:[#allocation2] sm:$0x1] 0.0
    %v36 = vld [vmem:[%s0] sm:$0xff]
    %v37 = vld [vmem:[%s0 + $0x8] sm:$0xff]
    %38 = vst [vmem:[#allocation2 + $0x1] sm:$0xff] %v36
    %39 = vst [vmem:[#allocation2 + $0x9] sm:$0xff] %v37
    %40 = vst [vmem:[#allocation2 + $0x11] sm:$0x1] 0.0
    %v41 = vld [vmem:[%s4] sm:$0x1]
    %v42 = vld [vmem:[%s4 + $0x1] sm:$0x1]
    %v43 = vld [vmem:[%s4 + $0x2] sm:$0x1]
    %v44 = vld [vmem:[%s4 + $0x3] sm:$0x1]
    %v45 = vld [vmem:[#allocation2] sm:$0xff]
    %v46 = vld [vmem:[#allocation2 + $0x8] sm:$0xff]
    %v47 = vpack.c.bf16 %v46, %v45
    %v48 = vld [vmem:[%s1] sm:$0xf]
    %v49 = vld [vmem:[%s1 + $0x4] sm:$0xf]
    %v50 = vld [vmem:[%s1 + $0x8] sm:$0xf]
    %v51 = vld [vmem:[%s1 + $0xc] sm:$0xf]
    %v52 = vld [vmem:[%s1 + $0x10] sm:$0xf]
    %v53 = vld [vmem:[%s1 + $0x14] sm:$0xf]
    %v54 = vld [vmem:[%s1 + $0x18] sm:$0xf]
    %v55 = vld [vmem:[%s1 + $0x1c] sm:$0xf]
    %v56 = vld [vmem:[%s1 + $0x20] sm:$0xf]
    %v57 = vld [vmem:[%s1 + $0x24] sm:$0xf]
    %v58 = vld [vmem:[%s1 + $0x28] sm:$0xf]
    %v59 = vld [vmem:[%s1 + $0x2c] sm:$0xf]
    %v60 = vld [vmem:[%s1 + $0x30] sm:$0xf]
    %v61 = vld [vmem:[%s1 + $0x34] sm:$0xf]
    %v62 = vld [vmem:[%s1 + $0x38] sm:$0xf]
    %v63 = vld [vmem:[%s1 + $0x3c] sm:$0xf]
    %v64 = vld [vmem:[#allocation2 + $0x1] sm:$0xff]
    %v65 = vld [vmem:[#allocation2 + $0x9] sm:$0xff]
    %v66 = vpack.c.bf16 %v65, %v64
    %s67 = scalar_lea.vmem %s1, 64
    %v68 = vld [vmem:[%s67] sm:$0xf]
    %v69 = vld [vmem:[%s67 + $0x4] sm:$0xf]
    %v70 = vld [vmem:[%s67 + $0x8] sm:$0xf]
    %v71 = vld [vmem:[%s67 + $0xc] sm:$0xf]
    %v72 = vld [vmem:[%s67 + $0x10] sm:$0xf]
    %v73 = vld [vmem:[%s67 + $0x14] sm:$0xf]
    %v74 = vld [vmem:[%s67 + $0x18] sm:$0xf]
    %v75 = vld [vmem:[%s67 + $0x1c] sm:$0xf]
    %v76 = vld [vmem:[%s67 + $0x20] sm:$0xf]
    %v77 = vld [vmem:[%s67 + $0x24] sm:$0xf]
    %v78 = vld [vmem:[%s67 + $0x28] sm:$0xf]
    %v79 = vld [vmem:[%s67 + $0x2c] sm:$0xf]
    %v80 = vld [vmem:[%s67 + $0x30] sm:$0xf]
    %v81 = vld [vmem:[%s67 + $0x34] sm:$0xf]
    %v82 = vld [vmem:[%s67 + $0x38] sm:$0xf]
    %v83 = vld [vmem:[%s67 + $0x3c] sm:$0xf]
    %v100 = vunpack.c.l.b16 %v68
    %v101 = vunpack.c.l.b16 %v69
    %v102 = vunpack.c.l.b16 %v70
    %v103 = vunpack.c.l.b16 %v71
    %v104 = vunpack.c.l.b16 %v72
    %v105 = vunpack.c.l.b16 %v73
    %v106 = vunpack.c.l.b16 %v74
    %v107 = vunpack.c.l.b16 %v75
    %v108 = vunpack.c.l.b16 %v76
    %v109 = vunpack.c.l.b16 %v77
    %v110 = vunpack.c.l.b16 %v78
    %v111 = vunpack.c.l.b16 %v79
    %v112 = vunpack.c.l.b16 %v80
    %v113 = vunpack.c.l.b16 %v81
    %v114 = vunpack.c.l.b16 %v82
    %v115 = vunpack.c.l.b16 %v83
    %v116 = vpack.c.b16 %v101, %v100
    %v117 = vpack.c.b16 %v103, %v102
    %v118 = vpack.c.b16 %v105, %v104
    %v119 = vpack.c.b16 %v107, %v106
    %v120 = vpack.c.b16 %v109, %v108
    %v121 = vpack.c.b16 %v111, %v110
    %v122 = vpack.c.b16 %v113, %v112
    %v123 = vpack.c.b16 %v115, %v114
    %132 = vmatprep.subr.bf16.mxu0 0
    %133 = vmatpush1.bf16.msra.mxu0 %v116
    %134 = vmatprep.subr.bf16.mxu0 0
    %135 = vmatpush1.bf16.msra.mxu0 %v117
    %136 = vmatprep.subr.bf16.mxu0 0
    %137 = vmatpush1.bf16.msra.mxu0 %v118
    %138 = vmatprep.subr.bf16.mxu0 0
    %139 = vmatpush1.bf16.msra.mxu0 %v119
    %140 = vmatprep.subr.bf16.mxu0 0
    %141 = vmatpush1.bf16.msra.mxu0 %v120
    %142 = vmatprep.subr.bf16.mxu0 0
    %143 = vmatpush1.bf16.msra.mxu0 %v121
    %144 = vmatprep.subr.bf16.mxu0 0
    %145 = vmatpush1.bf16.msra.mxu0 %v122
    %146 = vmatprep.subr.bf16.mxu0 0
    %147 = vmatpush1.bf16.msra.mxu0 %v123
    %148 = vmatprep.subr.bf16.mxu0 0
    %149 = vmatpush1.bf16.msra.mxu0 0
    %150 = vmatprep.subr.bf16.mxu0 0
    %151 = vmatpush1.bf16.msra.mxu0 0
    %152 = vmatprep.subr.bf16.mxu0 0
    %153 = vmatpush1.bf16.msra.mxu0 0
    %154 = vmatprep.subr.bf16.mxu0 0
    %155 = vmatpush1.bf16.msra.mxu0 0
    %156 = vmatprep.subr.bf16.mxu0 0
    %157 = vmatpush1.bf16.msra.mxu0 0
    %158 = vmatprep.subr.bf16.mxu0 0
    %159 = vmatpush1.bf16.msra.mxu0 0
    %160 = vmatprep.subr.bf16.mxu0 0
    %161 = vmatpush1.bf16.msra.mxu0 0
    %162 = vmatprep.subr.bf16.mxu0 0
    %163 = vmatpush1.bf16.msra.mxu0 0
    %164 = vmatprep.mubr.bf16.mxu0 0
    %165 = vmatmul.mubr.bf16.gmra.mrb[0].mxu0 %v66
    %v166 = vpop.f32.mrb[0].mxu0
    %v167 = vadd.f32 0.0, %v166
    %v168 = vpop.f32.mrb[0].mxu0
    %v169 = vpop.f32.mrb[0].mxu0
    %v170 = vadd.f32 0.0, %v169
    %v171 = vpop.f32.mrb[0].mxu0
    %172 = vdwg.mxu0
    %v189 = vunpack.c.l.b16 %v48
    %v190 = vunpack.c.l.b16 %v49
    %v191 = vunpack.c.l.b16 %v50
    %v192 = vunpack.c.l.b16 %v51
    %v193 = vunpack.c.l.b16 %v52
    %v194 = vunpack.c.l.b16 %v53
    %v195 = vunpack.c.l.b16 %v54
    %v196 = vunpack.c.l.b16 %v55
    %v197 = vunpack.c.l.b16 %v56
    %v198 = vunpack.c.l.b16 %v57
    %v199 = vunpack.c.l.b16 %v58
    %v200 = vunpack.c.l.b16 %v59
    %v201 = vunpack.c.l.b16 %v60
    %v202 = vunpack.c.l.b16 %v61
    %v203 = vunpack.c.l.b16 %v62
    %v204 = vunpack.c.l.b16 %v63
    %v205 = vpack.c.b16 %v190, %v189
    %v206 = vpack.c.b16 %v192, %v191
    %v207 = vpack.c.b16 %v194, %v193
    %v208 = vpack.c.b16 %v196, %v195
    %v209 = vpack.c.b16 %v198, %v197
    %v210 = vpack.c.b16 %v200, %v199
    %v211 = vpack.c.b16 %v202, %v201
    %v212 = vpack.c.b16 %v204, %v203
    %221 = vmatprep.subr.bf16.mxu0 0
    %222 = vmatpush1.bf16.msra.mxu0 %v205
    %223 = vmatprep.subr.bf16.mxu0 0
    %224 = vmatpush1.bf16.msra.mxu0 %v206
    %225 = vmatprep.subr.bf16.mxu0 0
    %226 = vmatpush1.bf16.msra.mxu0 %v207
    %227 = vmatprep.subr.bf16.mxu0 0
    %228 = vmatpush1.bf16.msra.mxu0 %v208
    %229 = vmatprep.subr.bf16.mxu0 0
    %230 = vmatpush1.bf16.msra.mxu0 %v209
    %231 = vmatprep.subr.bf16.mxu0 0
    %232 = vmatpush1.bf16.msra.mxu0 %v210
    %233 = vmatprep.subr.bf16.mxu0 0
    %234 = vmatpush1.bf16.msra.mxu0 %v211
    %235 = vmatprep.subr.bf16.mxu0 0
    %236 = vmatpush1.bf16.msra.mxu0 %v212
    %237 = vmatprep.subr.bf16.mxu0 0
    %238 = vmatpush1.bf16.msra.mxu0 0
    %239 = vmatprep.subr.bf16.mxu0 0
    %240 = vmatpush1.bf16.msra.mxu0 0
    %241 = vmatprep.subr.bf16.mxu0 0
    %242 = vmatpush1.bf16.msra.mxu0 0
    %243 = vmatprep.subr.bf16.mxu0 0
    %244 = vmatpush1.bf16.msra.mxu0 0
    %245 = vmatprep.subr.bf16.mxu0 0
    %246 = vmatpush1.bf16.msra.mxu0 0
    %247 = vmatprep.subr.bf16.mxu0 0
    %248 = vmatpush1.bf16.msra.mxu0 0
    %249 = vmatprep.subr.bf16.mxu0 0
    %250 = vmatpush1.bf16.msra.mxu0 0
    %251 = vmatprep.subr.bf16.mxu0 0
    %252 = vmatpush1.bf16.msra.mxu0 0
    %253 = vmatprep.mubr.bf16.mxu0 0
    %254 = vmatmul.mubr.bf16.gmra.mrb[0].mxu0 %v47
    %v255 = vpop.f32.mrb[0].mxu0
    %v256 = vadd.f32 %v167, %v255
    %v257 = vpop.f32.mrb[0].mxu0
    %v258 = vpop.f32.mrb[0].mxu0
    %v259 = vadd.f32 %v170, %v258
    %v260 = vpop.f32.mrb[0].mxu0
    %261 = vdwg.mxu0
    %v262 = vld [vmem:[#allocation2 + $0x2] sm:$0xff]
    %v263 = vld [vmem:[#allocation2 + $0xa] sm:$0xff]
    %v264 = vpack.c.bf16 %v263, %v262
    %s265 = scalar_lea.vmem %s1, 128
    %v266 = vld [vmem:[%s265] sm:$0xf]
    %v267 = vld [vmem:[%s265 + $0x4] sm:$0xf]
    %v268 = vld [vmem:[%s265 + $0x8] sm:$0xf]
    %v269 = vld [vmem:[%s265 + $0xc] sm:$0xf]
    %v270 = vld [vmem:[%s265 + $0x10] sm:$0xf]
    %v271 = vld [vmem:[%s265 + $0x14] sm:$0xf]
    %v272 = vld [vmem:[%s265 + $0x18] sm:$0xf]
    %v273 = vld [vmem:[%s265 + $0x1c] sm:$0xf]
    %v274 = vld [vmem:[%s265 + $0x20] sm:$0xf]
    %v275 = vld [vmem:[%s265 + $0x24] sm:$0xf]
    %v276 = vld [vmem:[%s265 + $0x28] sm:$0xf]
    %v277 = vld [vmem:[%s265 + $0x2c] sm:$0xf]
    %v278 = vld [vmem:[%s265 + $0x30] sm:$0xf]
    %v279 = vld [vmem:[%s265 + $0x34] sm:$0xf]
    %v280 = vld [vmem:[%s265 + $0x38] sm:$0xf]
    %v281 = vld [vmem:[%s265 + $0x3c] sm:$0xf]
    %v298 = vunpack.c.l.b16 %v266
    %v299 = vunpack.c.l.b16 %v267
    %v300 = vunpack.c.l.b16 %v268
    %v301 = vunpack.c.l.b16 %v269
    %v302 = vunpack.c.l.b16 %v270
    %v303 = vunpack.c.l.b16 %v271
    %v304 = vunpack.c.l.b16 %v272
    %v305 = vunpack.c.l.b16 %v273
    %v306 = vunpack.c.l.b16 %v274
    %v307 = vunpack.c.l.b16 %v275
    %v308 = vunpack.c.l.b16 %v276
    %v309 = vunpack.c.l.b16 %v277
    %v310 = vunpack.c.l.b16 %v278
    %v311 = vunpack.c.l.b16 %v279
    %v312 = vunpack.c.l.b16 %v280
    %v313 = vunpack.c.l.b16 %v281
    %v314 = vpack.c.b16 %v299, %v298
    %v315 = vpack.c.b16 %v301, %v300
    %v316 = vpack.c.b16 %v303, %v302
    %v317 = vpack.c.b16 %v305, %v304
    %v318 = vpack.c.b16 %v307, %v306
    %v319 = vpack.c.b16 %v309, %v308
    %v320 = vpack.c.b16 %v311, %v310
    %v321 = vpack.c.b16 %v313, %v312
    %330 = vmatprep.subr.bf16.mxu0 0
    %331 = vmatpush1.bf16.msra.mxu0 %v314
    %332 = vmatprep.subr.bf16.mxu0 0
    %333 = vmatpush1.bf16.msra.mxu0 %v315
    %334 = vmatprep.subr.bf16.mxu0 0
    %335 = vmatpush1.bf16.msra.mxu0 %v316
    %336 = vmatprep.subr.bf16.mxu0 0
    %337 = vmatpush1.bf16.msra.mxu0 %v317
    %338 = vmatprep.subr.bf16.mxu0 0
    %339 = vmatpush1.bf16.msra.mxu0 %v318
    %340 = vmatprep.subr.bf16.mxu0 0
    %341 = vmatpush1.bf16.msra.mxu0 %v319
    %342 = vmatprep.subr.bf16.mxu0 0
    %343 = vmatpush1.bf16.msra.mxu0 %v320
    %344 = vmatprep.subr.bf16.mxu0 0
    %345 = vmatpush1.bf16.msra.mxu0 %v321
    %346 = vmatprep.subr.bf16.mxu0 0
    %347 = vmatpush1.bf16.msra.mxu0 0
    %348 = vmatprep.subr.bf16.mxu0 0
    %349 = vmatpush1.bf16.msra.mxu0 0
    %350 = vmatprep.subr.bf16.mxu0 0
    %351 = vmatpush1.bf16.msra.mxu0 0
    %352 = vmatprep.subr.bf16.mxu0 0
    %353 = vmatpush1.bf16.msra.mxu0 0
    %354 = vmatprep.subr.bf16.mxu0 0
    %355 = vmatpush1.bf16.msra.mxu0 0
    %356 = vmatprep.subr.bf16.mxu0 0
    %357 = vmatpush1.bf16.msra.mxu0 0
    %358 = vmatprep.subr.bf16.mxu0 0
    %359 = vmatpush1.bf16.msra.mxu0 0
    %360 = vmatprep.subr.bf16.mxu0 0
    %361 = vmatpush1.bf16.msra.mxu0 0
    %362 = vmatprep.mubr.bf16.mxu0 0
    %363 = vmatmul.mubr.bf16.gmra.mrb[0].mxu0 %v264
    %v364 = vpop.f32.mrb[0].mxu0
    %v365 = vadd.f32 0.0, %v364
    %v366 = vpop.f32.mrb[0].mxu0
    %v367 = vpop.f32.mrb[0].mxu0
    %v368 = vadd.f32 0.0, %v367
    %v369 = vpop.f32.mrb[0].mxu0
    %370 = vdwg.mxu0
    %v371 = vadd.f32 %v256, %v365
    %v372 = vadd.f32 %v259, %v368
    %v373 = vadd.f32 %v371, %v372
    %v374 = vrot.slane %v373, 4
    %v375 = vadd.f32 %v373, %v374
    %v376 = vrot.slane %v375, 2
    %v377 = vadd.f32 %v375, %v376
    %v378 = vrot.slane %v377, 1
    %v379 = vadd.f32 %v377, %v378
    %v380 = vld [vmem:[#allocation3] sm:$0xff]
    %v381 = vld [vmem:[#allocation3 + $0x8] sm:$0xff]
    %v382 = vld [vmem:[#allocation3 + $0x10] sm:$0xff]
    %v383 = vld [vmem:[#allocation3 + $0x18] sm:$0xff]
    %v384 = vld [vmem:[#allocation3 + $0x20] sm:$0xff]
    %v385 = vld [vmem:[#allocation3 + $0x28] sm:$0xff]
    %v386 = vld [vmem:[#allocation3 + $0x30] sm:$0xff]
    %v387 = vld [vmem:[#allocation3 + $0x38] sm:$0xff]
    %v388 = vld [vmem:[#allocation3 + $0x40] sm:$0xff]
    %v389 = vld [vmem:[#allocation3 + $0x48] sm:$0xff]
    %v390 = vld [vmem:[#allocation3 + $0x50] sm:$0xff]
    %v391 = vld [vmem:[#allocation3 + $0x58] sm:$0xff]
    %v392 = vld [vmem:[#allocation3 + $0x60] sm:$0xff]
    %v393 = vld [vmem:[#allocation3 + $0x68] sm:$0xff]
    %v394 = vld [vmem:[#allocation3 + $0x70] sm:$0xff]
    %v395 = vld [vmem:[#allocation3 + $0x78] sm:$0xff]
    %396 = vmatprep.subr.mxu0 0.0
    %397 = vmatpush1.msra.mxu0 %v380
    %398 = vmatprep.subr.mxu0 0.0
    %399 = vmatpush1.msra.mxu0 %v381
    %400 = vmatprep.subr.mxu0 0.0
    %401 = vmatpush1.msra.mxu0 %v382
    %402 = vmatprep.subr.mxu0 0.0
    %403 = vmatpush1.msra.mxu0 %v383
    %404 = vmatprep.subr.mxu0 0.0
    %405 = vmatpush1.msra.mxu0 %v384
    %406 = vmatprep.subr.mxu0 0.0
    %407 = vmatpush1.msra.mxu0 %v385
    %408 = vmatprep.subr.mxu0 0.0
    %409 = vmatpush1.msra.mxu0 %v386
    %410 = vmatprep.subr.mxu0 0.0
    %411 = vmatpush1.msra.mxu0 %v387
    %412 = vmatprep.subr.mxu0 0.0
    %413 = vmatpush1.msra.mxu0 %v388
    %414 = vmatprep.subr.mxu0 0.0
    %415 = vmatpush1.msra.mxu0 %v389
    %416 = vmatprep.subr.mxu0 0.0
    %417 = vmatpush1.msra.mxu0 %v390
    %418 = vmatprep.subr.mxu0 0.0
    %419 = vmatpush1.msra.mxu0 %v391
    %420 = vmatprep.subr.mxu0 0.0
    %421 = vmatpush1.msra.mxu0 %v392
    %422 = vmatprep.subr.mxu0 0.0
    %423 = vmatpush1.msra.mxu0 %v393
    %424 = vmatprep.subr.mxu0 0.0
    %425 = vmatpush1.msra.mxu0 %v394
    %426 = vmatprep.subr.mxu0 0.0
    %427 = vmatpush1.msra.mxu0 %v395
    %428 = vmatprep.subr.mxu0 0.0
    %429 = vmatpush1.msra.mxu0 0.0
    %430 = vmatprep.subr.mxu0 0.0
    %431 = vmatpush1.msra.mxu0 0.0
    %432 = vmatprep.subr.mxu0 0.0
    %433 = vmatpush1.msra.mxu0 0.0
    %434 = vmatprep.subr.mxu0 0.0
    %435 = vmatpush1.msra.mxu0 0.0
    %436 = vmatprep.subr.mxu0 0.0
    %437 = vmatpush1.msra.mxu0 0.0
    %438 = vmatprep.subr.mxu0 0.0
    %439 = vmatpush1.msra.mxu0 0.0
    %440 = vmatprep.subr.mxu0 0.0
    %441 = vmatpush1.msra.mxu0 0.0
    %442 = vmatprep.subr.mxu0 0.0
    %443 = vmatpush1.msra.mxu0 0.0
    %444 = vmatprep.subr.mxu0 0.0
    %445 = vmatpush1.msra.mxu0 0.0
    %446 = vmatprep.subr.mxu0 0.0
    %447 = vmatpush1.msra.mxu0 0.0
    %448 = vmatprep.subr.mxu0 0.0
    %449 = vmatpush1.msra.mxu0 0.0
    %450 = vmatprep.subr.mxu0 0.0
    %451 = vmatpush1.msra.mxu0 0.0
    %452 = vmatprep.subr.mxu0 0.0
    %453 = vmatpush1.msra.mxu0 0.0
    %454 = vmatprep.subr.mxu0 0.0
    %455 = vmatpush1.msra.mxu0 0.0
    %456 = vmatprep.subr.mxu0 0.0
    %457 = vmatpush1.msra.mxu0 0.0
    %458 = vmatprep.subr.mxu0 0.0
    %459 = vmatpush1.msra.mxu0 0.0
    %460 = vmatprep.mubr.f32.mxu0 0.0
    %461 = vmatmul.mubr.f32.gmra.mrb[0].mxu0 %v379
    %v462 = vpop.f32.mrb[0].mxu0
    %v463 = vadd.f32 0.0, %v462
    %v464 = vpop.f32.mrb[0].mxu0
    %465 = vdwg.mxu0
    %v466 = vlaneseq
    %v467 = vshrl.u32 %v466, 7
    %v468 = vsub.s32 0, %v467
    %v469 = vrot.slane %v463, %v468
    %v470 = vsub.f32 %v371, %v469
    %v471 = vsub.f32 %v372, %v469
    %v472 = vmul.f32 %v470, %v470
    %v473 = vmul.f32 %v471, %v471
    %v474 = vadd.f32 %v472, %v473
    %v475 = vrot.slane %v474, 4
    %v476 = vadd.f32 %v474, %v475
    %v477 = vrot.slane %v476, 2
    %v478 = vadd.f32 %v476, %v477
    %v479 = vrot.slane %v478, 1
    %v480 = vadd.f32 %v478, %v479
    %481 = vmatprep.subr.mxu0 0.0
    %482 = vmatpush1.msra.mxu0 %v380
    %483 = vmatprep.subr.mxu0 0.0
    %484 = vmatpush1.msra.mxu0 %v381
    %485 = vmatprep.subr.mxu0 0.0
    %486 = vmatpush1.msra.mxu0 %v382
    %487 = vmatprep.subr.mxu0 0.0
    %488 = vmatpush1.msra.mxu0 %v383
    %489 = vmatprep.subr.mxu0 0.0
    %490 = vmatpush1.msra.mxu0 %v384
    %491 = vmatprep.subr.mxu0 0.0
    %492 = vmatpush1.msra.mxu0 %v385
    %493 = vmatprep.subr.mxu0 0.0
    %494 = vmatpush1.msra.mxu0 %v386
    %495 = vmatprep.subr.mxu0 0.0
    %496 = vmatpush1.msra.mxu0 %v387
    %497 = vmatprep.subr.mxu0 0.0
    %498 = vmatpush1.msra.mxu0 %v388
    %499 = vmatprep.subr.mxu0 0.0
    %500 = vmatpush1.msra.mxu0 %v389
    %501 = vmatprep.subr.mxu0 0.0
    %502 = vmatpush1.msra.mxu0 %v390
    %503 = vmatprep.subr.mxu0 0.0
    %504 = vmatpush1.msra.mxu0 %v391
    %505 = vmatprep.subr.mxu0 0.0
    %506 = vmatpush1.msra.mxu0 %v392
    %507 = vmatprep.subr.mxu0 0.0
    %508 = vmatpush1.msra.mxu0 %v393
    %509 = vmatprep.subr.mxu0 0.0
    %510 = vmatpush1.msra.mxu0 %v394
    %511 = vmatprep.subr.mxu0 0.0
    %512 = vmatpush1.msra.mxu0 %v395
    %513 = vmatprep.subr.mxu0 0.0
    %514 = vmatpush1.msra.mxu0 0.0
    %515 = vmatprep.subr.mxu0 0.0
    %516 = vmatpush1.msra.mxu0 0.0
    %517 = vmatprep.subr.mxu0 0.0
    %518 = vmatpush1.msra.mxu0 0.0
    %519 = vmatprep.subr.mxu0 0.0
    %520 = vmatpush1.msra.mxu0 0.0
    %521 = vmatprep.subr.mxu0 0.0
    %522 = vmatpush1.msra.mxu0 0.0
    %523 = vmatprep.subr.mxu0 0.0
    %524 = vmatpush1.msra.mxu0 0.0
    %525 = vmatprep.subr.mxu0 0.0
    %526 = vmatpush1.msra.mxu0 0.0
    %527 = vmatprep.subr.mxu0 0.0
    %528 = vmatpush1.msra.mxu0 0.0
    %529 = vmatprep.subr.mxu0 0.0
    %530 = vmatpush1.msra.mxu0 0.0
    %531 = vmatprep.subr.mxu0 0.0
    %532 = vmatpush1.msra.mxu0 0.0
    %533 = vmatprep.subr.mxu0 0.0
    %534 = vmatpush1.msra.mxu0 0.0
    %535 = vmatprep.subr.mxu0 0.0
    %536 = vmatpush1.msra.mxu0 0.0
    %537 = vmatprep.subr.mxu0 0.0
    %538 = vmatpush1.msra.mxu0 0.0
    %539 = vmatprep.subr.mxu0 0.0
    %540 = vmatpush1.msra.mxu0 0.0
    %541 = vmatprep.subr.mxu0 0.0
    %542 = vmatpush1.msra.mxu0 0.0
    %543 = vmatprep.subr.mxu0 0.0
    %544 = vmatpush1.msra.mxu0 0.0
    %545 = vmatprep.mubr.f32.mxu0 0.0
    %546 = vmatmul.mubr.f32.gmra.mrb[0].mxu0 %v480
    %v547 = vpop.f32.mrb[0].mxu0
    %v548 = vadd.f32 1e-05, %v547
    %v549 = vpop.f32.mrb[0].mxu0
    %550 = vdwg.mxu0
    %v551 = vrsqrt.pop %v548
    %v552 = vmul.f32 %v551, %v41
    %v553 = vlaneseq
    %v554 = vshrl.u32 %v553, 7
    %v555 = vsub.s32 0, %v554
    %v556 = vrot.slane %v552, %v555
    %v557 = vmul.f32 %v470, %v556
    %v558 = vmul.f32 %v471, %v556
    %v559 = vlaneseq
    %v560 = vshrl.u32 %v559, 7
    %v561 = vsub.s32 0, %v560
    %v562 = vrot.slane %v42, %v561
    %v563 = vadd.f32 %v557, %v562
    %v564 = vadd.f32 %v558, %v562
    %v565 = vmax.f32 %v563, 0.0
    %v566 = vmax.f32 %v564, 0.0
    %567 = vst [vmem:[#allocation2 + $0x1] sm:$0xff] %v565
    %568 = vst [vmem:[#allocation2 + $0x9] sm:$0xff] %v566
    %v569 = vld [vmem:[#allocation2] sm:$0xff]
    %v570 = vld [vmem:[#allocation2 + $0x8] sm:$0xff]
    %v571 = vpack.c.bf16 %v570, %v569
    %v572 = vld [vmem:[%s2] sm:$0xf]
    %v573 = vld [vmem:[%s2 + $0x4] sm:$0xf]
    %v574 = vld [vmem:[%s2 + $0x8] sm:$0xf]
    %v575 = vld [vmem:[%s2 + $0xc] sm:$0xf]
    %v576 = vld [vmem:[%s2 + $0x10] sm:$0xf]
    %v577 = vld [vmem:[%s2 + $0x14] sm:$0xf]
    %v578 = vld [vmem:[%s2 + $0x18] sm:$0xf]
    %v579 = vld [vmem:[%s2 + $0x1c] sm:$0xf]
    %v580 = vld [vmem:[%s2 + $0x20] sm:$0xf]
    %v581 = vld [vmem:[%s2 + $0x24] sm:$0xf]
    %v582 = vld [vmem:[%s2 + $0x28] sm:$0xf]
    %v583 = vld [vmem:[%s2 + $0x2c] sm:$0xf]
    %v584 = vld [vmem:[%s2 + $0x30] sm:$0xf]
    %v585 = vld [vmem:[%s2 + $0x34] sm:$0xf]
    %v586 = vld [vmem:[%s2 + $0x38] sm:$0xf]
    %v587 = vld [vmem:[%s2 + $0x3c] sm:$0xf]
    %v588 = vld [vmem:[#allocation2 + $0x1] sm:$0xff]
    %v589 = vld [vmem:[#allocation2 + $0x9] sm:$0xff]
    %v590 = vpack.c.bf16 %v589, %v588
    %s591 = scalar_lea.vmem %s2, 64
    %v592 = vld [vmem:[%s591] sm:$0xf]
    %v593 = vld [vmem:[%s591 + $0x4] sm:$0xf]
    %v594 = vld [vmem:[%s591 + $0x8] sm:$0xf]
    %v595 = vld [vmem:[%s591 + $0xc] sm:$0xf]
    %v596 = vld [vmem:[%s591 + $0x10] sm:$0xf]
    %v597 = vld [vmem:[%s591 + $0x14] sm:$0xf]
    %v598 = vld [vmem:[%s591 + $0x18] sm:$0xf]
    %v599 = vld [vmem:[%s591 + $0x1c] sm:$0xf]
    %v600 = vld [vmem:[%s591 + $0x20] sm:$0xf]
    %v601 = vld [vmem:[%s591 + $0x24] sm:$0xf]
    %v602 = vld [vmem:[%s591 + $0x28] sm:$0xf]
    %v603 = vld [vmem:[%s591 + $0x2c] sm:$0xf]
    %v604 = vld [vmem:[%s591 + $0x30] sm:$0xf]
    %v605 = vld [vmem:[%s591 + $0x34] sm:$0xf]
    %v606 = vld [vmem:[%s591 + $0x38] sm:$0xf]
    %v607 = vld [vmem:[%s591 + $0x3c] sm:$0xf]
    %v624 = vunpack.c.l.b16 %v592
    %v625 = vunpack.c.l.b16 %v593
    %v626 = vunpack.c.l.b16 %v594
    %v627 = vunpack.c.l.b16 %v595
    %v628 = vunpack.c.l.b16 %v596
    %v629 = vunpack.c.l.b16 %v597
    %v630 = vunpack.c.l.b16 %v598
    %v631 = vunpack.c.l.b16 %v599
    %v632 = vunpack.c.l.b16 %v600
    %v633 = vunpack.c.l.b16 %v601
    %v634 = vunpack.c.l.b16 %v602
    %v635 = vunpack.c.l.b16 %v603
    %v636 = vunpack.c.l.b16 %v604
    %v637 = vunpack.c.l.b16 %v605
    %v638 = vunpack.c.l.b16 %v606
    %v639 = vunpack.c.l.b16 %v607
    %v640 = vpack.c.b16 %v625, %v624
    %v641 = vpack.c.b16 %v627, %v626
    %v642 = vpack.c.b16 %v629, %v628
    %v643 = vpack.c.b16 %v631, %v630
    %v644 = vpack.c.b16 %v633, %v632
    %v645 = vpack.c.b16 %v635, %v634
    %v646 = vpack.c.b16 %v637, %v636
    %v647 = vpack.c.b16 %v639, %v638
    %656 = vmatprep.subr.bf16.mxu0 0
    %657 = vmatpush1.bf16.msra.mxu0 %v640
    %658 = vmatprep.subr.bf16.mxu0 0
    %659 = vmatpush1.bf16.msra.mxu0 %v641
    %660 = vmatprep.subr.bf16.mxu0 0
    %661 = vmatpush1.bf16.msra.mxu0 %v642
    %662 = vmatprep.subr.bf16.mxu0 0
    %663 = vmatpush1.bf16.msra.mxu0 %v643
    %664 = vmatprep.subr.bf16.mxu0 0
    %665 = vmatpush1.bf16.msra.mxu0 %v644
    %666 = vmatprep.subr.bf16.mxu0 0
    %667 = vmatpush1.bf16.msra.mxu0 %v645
    %668 = vmatprep.subr.bf16.mxu0 0
    %669 = vmatpush1.bf16.msra.mxu0 %v646
    %670 = vmatprep.subr.bf16.mxu0 0
    %671 = vmatpush1.bf16.msra.mxu0 %v647
    %672 = vmatprep.subr.bf16.mxu0 0
    %673 = vmatpush1.bf16.msra.mxu0 0
    %674 = vmatprep.subr.bf16.mxu0 0
    %675 = vmatpush1.bf16.msra.mxu0 0
    %676 = vmatprep.subr.bf16.mxu0 0
    %677 = vmatpush1.bf16.msra.mxu0 0
    %678 = vmatprep.subr.bf16.mxu0 0
    %679 = vmatpush1.bf16.msra.mxu0 0
    %680 = vmatprep.subr.bf16.mxu0 0
    %681 = vmatpush1.bf16.msra.mxu0 0
    %682 = vmatprep.subr.bf16.mxu0 0
    %683 = vmatpush1.bf16.msra.mxu0 0
    %684 = vmatprep.subr.bf16.mxu0 0
    %685 = vmatpush1.bf16.msra.mxu0 0
    %686 = vmatprep.subr.bf16.mxu0 0
    %687 = vmatpush1.bf16.msra.mxu0 0
    %688 = vmatprep.mubr.bf16.mxu0 0
    %689 = vmatmul.mubr.bf16.gmra.mrb[0].mxu0 %v590
    %v690 = vpop.f32.mrb[0].mxu0
    %v691 = vadd.f32 0.0, %v690
    %v692 = vpop.f32.mrb[0].mxu0
    %v693 = vpop.f32.mrb[0].mxu0
    %v694 = vadd.f32 0.0, %v693
    %v695 = vpop.f32.mrb[0].mxu0
    %696 = vdwg.mxu0
    %v713 = vunpack.c.l.b16 %v572
    %v714 = vunpack.c.l.b16 %v573
    %v715 = vunpack.c.l.b16 %v574
    %v716 = vunpack.c.l.b16 %v575
    %v717 = vunpack.c.l.b16 %v576
    %v718 = vunpack.c.l.b16 %v577
    %v719 = vunpack.c.l.b16 %v578
    %v720 = vunpack.c.l.b16 %v579
    %v721 = vunpack.c.l.b16 %v580
    %v722 = vunpack.c.l.b16 %v581
    %v723 = vunpack.c.l.b16 %v582
    %v724 = vunpack.c.l.b16 %v583
    %v725 = vunpack.c.l.b16 %v584
    %v726 = vunpack.c.l.b16 %v585
    %v727 = vunpack.c.l.b16 %v586
    %v728 = vunpack.c.l.b16 %v587
    %v729 = vpack.c.b16 %v714, %v713
    %v730 = vpack.c.b16 %v716, %v715
    %v731 = vpack.c.b16 %v718, %v717
    %v732 = vpack.c.b16 %v720, %v719
    %v733 = vpack.c.b16 %v722, %v721
    %v734 = vpack.c.b16 %v724, %v723
    %v735 = vpack.c.b16 %v726, %v725
    %v736 = vpack.c.b16 %v728, %v727
    %745 = vmatprep.subr.bf16.mxu0 0
    %746 = vmatpush1.bf16.msra.mxu0 %v729
    %747 = vmatprep.subr.bf16.mxu0 0
    %748 = vmatpush1.bf16.msra.mxu0 %v730
    %749 = vmatprep.subr.bf16.mxu0 0
    %750 = vmatpush1.bf16.msra.mxu0 %v731
    %751 = vmatprep.subr.bf16.mxu0 0
    %752 = vmatpush1.bf16.msra.mxu0 %v732
    %753 = vmatprep.subr.bf16.mxu0 0
    %754 = vmatpush1.bf16.msra.mxu0 %v733
    %755 = vmatprep.subr.bf16.mxu0 0
    %756 = vmatpush1.bf16.msra.mxu0 %v734
    %757 = vmatprep.subr.bf16.mxu0 0
    %758 = vmatpush1.bf16.msra.mxu0 %v735
    %759 = vmatprep.subr.bf16.mxu0 0
    %760 = vmatpush1.bf16.msra.mxu0 %v736
    %761 = vmatprep.subr.bf16.mxu0 0
    %762 = vmatpush1.bf16.msra.mxu0 0
    %763 = vmatprep.subr.bf16.mxu0 0
    %764 = vmatpush1.bf16.msra.mxu0 0
    %765 = vmatprep.subr.bf16.mxu0 0
    %766 = vmatpush1.bf16.msra.mxu0 0
    %767 = vmatprep.subr.bf16.mxu0 0
    %768 = vmatpush1.bf16.msra.mxu0 0
    %769 = vmatprep.subr.bf16.mxu0 0
    %770 = vmatpush1.bf16.msra.mxu0 0
    %771 = vmatprep.subr.bf16.mxu0 0
    %772 = vmatpush1.bf16.msra.mxu0 0
    %773 = vmatprep.subr.bf16.mxu0 0
    %774 = vmatpush1.bf16.msra.mxu0 0
    %775 = vmatprep.subr.bf16.mxu0 0
    %776 = vmatpush1.bf16.msra.mxu0 0
    %777 = vmatprep.mubr.bf16.mxu0 0
    %778 = vmatmul.mubr.bf16.gmra.mrb[0].mxu0 %v571
    %v779 = vpop.f32.mrb[0].mxu0
    %v780 = vadd.f32 %v691, %v779
    %v781 = vpop.f32.mrb[0].mxu0
    %v782 = vpop.f32.mrb[0].mxu0
    %v783 = vadd.f32 %v694, %v782
    %v784 = vpop.f32.mrb[0].mxu0
    %785 = vdwg.mxu0
    %v786 = vld [vmem:[#allocation2 + $0x2] sm:$0xff]
    %v787 = vld [vmem:[#allocation2 + $0xa] sm:$0xff]
    %v788 = vpack.c.bf16 %v787, %v786
    %s789 = scalar_lea.vmem %s2, 128
    %v790 = vld [vmem:[%s789] sm:$0xf]
    %v791 = vld [vmem:[%s789 + $0x4] sm:$0xf]
    %v792 = vld [vmem:[%s789 + $0x8] sm:$0xf]
    %v793 = vld [vmem:[%s789 + $0xc] sm:$0xf]
    %v794 = vld [vmem:[%s789 + $0x10] sm:$0xf]
    %v795 = vld [vmem:[%s789 + $0x14] sm:$0xf]
    %v796 = vld [vmem:[%s789 + $0x18] sm:$0xf]
    %v797 = vld [vmem:[%s789 + $0x1c] sm:$0xf]
    %v798 = vld [vmem:[%s789 + $0x20] sm:$0xf]
    %v799 = vld [vmem:[%s789 + $0x24] sm:$0xf]
    %v800 = vld [vmem:[%s789 + $0x28] sm:$0xf]
    %v801 = vld [vmem:[%s789 + $0x2c] sm:$0xf]
    %v802 = vld [vmem:[%s789 + $0x30] sm:$0xf]
    %v803 = vld [vmem:[%s789 + $0x34] sm:$0xf]
    %v804 = vld [vmem:[%s789 + $0x38] sm:$0xf]
    %v805 = vld [vmem:[%s789 + $0x3c] sm:$0xf]
    %v822 = vunpack.c.l.b16 %v790
    %v823 = vunpack.c.l.b16 %v791
    %v824 = vunpack.c.l.b16 %v792
    %v825 = vunpack.c.l.b16 %v793
    %v826 = vunpack.c.l.b16 %v794
    %v827 = vunpack.c.l.b16 %v795
    %v828 = vunpack.c.l.b16 %v796
    %v829 = vunpack.c.l.b16 %v797
    %v830 = vunpack.c.l.b16 %v798
    %v831 = vunpack.c.l.b16 %v799
    %v832 = vunpack.c.l.b16 %v800
    %v833 = vunpack.c.l.b16 %v801
    %v834 = vunpack.c.l.b16 %v802
    %v835 = vunpack.c.l.b16 %v803
    %v836 = vunpack.c.l.b16 %v804
    %v837 = vunpack.c.l.b16 %v805
    %v838 = vpack.c.b16 %v823, %v822
    %v839 = vpack.c.b16 %v825, %v824
    %v840 = vpack.c.b16 %v827, %v826
    %v841 = vpack.c.b16 %v829, %v828
    %v842 = vpack.c.b16 %v831, %v830
    %v843 = vpack.c.b16 %v833, %v832
    %v844 = vpack.c.b16 %v835, %v834
    %v845 = vpack.c.b16 %v837, %v836
    %854 = vmatprep.subr.bf16.mxu0 0
    %855 = vmatpush1.bf16.msra.mxu0 %v838
    %856 = vmatprep.subr.bf16.mxu0 0
    %857 = vmatpush1.bf16.msra.mxu0 %v839
    %858 = vmatprep.subr.bf16.mxu0 0
    %859 = vmatpush1.bf16.msra.mxu0 %v840
    %860 = vmatprep.subr.bf16.mxu0 0
    %861 = vmatpush1.bf16.msra.mxu0 %v841
    %862 = vmatprep.subr.bf16.mxu0 0
    %863 = vmatpush1.bf16.msra.mxu0 %v842
    %864 = vmatprep.subr.bf16.mxu0 0
    %865 = vmatpush1.bf16.msra.mxu0 %v843
    %866 = vmatprep.subr.bf16.mxu0 0
    %867 = vmatpush1.bf16.msra.mxu0 %v844
    %868 = vmatprep.subr.bf16.mxu0 0
    %869 = vmatpush1.bf16.msra.mxu0 %v845
    %870 = vmatprep.subr.bf16.mxu0 0
    %871 = vmatpush1.bf16.msra.mxu0 0
    %872 = vmatprep.subr.bf16.mxu0 0
    %873 = vmatpush1.bf16.msra.mxu0 0
    %874 = vmatprep.subr.bf16.mxu0 0
    %875 = vmatpush1.bf16.msra.mxu0 0
    %876 = vmatprep.subr.bf16.mxu0 0
    %877 = vmatpush1.bf16.msra.mxu0 0
    %878 = vmatprep.subr.bf16.mxu0 0
    %879 = vmatpush1.bf16.msra.mxu0 0
    %880 = vmatprep.subr.bf16.mxu0 0
    %881 = vmatpush1.bf16.msra.mxu0 0
    %882 = vmatprep.subr.bf16.mxu0 0
    %883 = vmatpush1.bf16.msra.mxu0 0
    %884 = vmatprep.subr.bf16.mxu0 0
    %885 = vmatpush1.bf16.msra.mxu0 0
    %886 = vmatprep.mubr.bf16.mxu0 0
    %887 = vmatmul.mubr.bf16.gmra.mrb[0].mxu0 %v788
    %v888 = vpop.f32.mrb[0].mxu0
    %v889 = vadd.f32 0.0, %v888
    %v890 = vpop.f32.mrb[0].mxu0
    %v891 = vpop.f32.mrb[0].mxu0
    %v892 = vadd.f32 0.0, %v891
    %v893 = vpop.f32.mrb[0].mxu0
    %894 = vdwg.mxu0
    %v895 = vadd.f32 %v780, %v889
    %v896 = vadd.f32 %v783, %v892
    %v897 = vadd.f32 %v895, %v896
    %v898 = vrot.slane %v897, 4
    %v899 = vadd.f32 %v897, %v898
    %v900 = vrot.slane %v899, 2
    %v901 = vadd.f32 %v899, %v900
    %v902 = vrot.slane %v901, 1
    %v903 = vadd.f32 %v901, %v902
    %v904 = vld [vmem:[#allocation3] sm:$0xff]
    %v905 = vld [vmem:[#allocation3 + $0x8] sm:$0xff]
    %v906 = vld [vmem:[#allocation3 + $0x10] sm:$0xff]
    %v907 = vld [vmem:[#allocation3 + $0x18] sm:$0xff]
    %v908 = vld [vmem:[#allocation3 + $0x20] sm:$0xff]
    %v909 = vld [vmem:[#allocation3 + $0x28] sm:$0xff]
    %v910 = vld [vmem:[#allocation3 + $0x30] sm:$0xff]
    %v911 = vld [vmem:[#allocation3 + $0x38] sm:$0xff]
    %v912 = vld [vmem:[#allocation3 + $0x40] sm:$0xff]
    %v913 = vld [vmem:[#allocation3 + $0x48] sm:$0xff]
    %v914 = vld [vmem:[#allocation3 + $0x50] sm:$0xff]
    %v915 = vld [vmem:[#allocation3 + $0x58] sm:$0xff]
    %v916 = vld [vmem:[#allocation3 + $0x60] sm:$0xff]
    %v917 = vld [vmem:[#allocation3 + $0x68] sm:$0xff]
    %v918 = vld [vmem:[#allocation3 + $0x70] sm:$0xff]
    %v919 = vld [vmem:[#allocation3 + $0x78] sm:$0xff]
    %920 = vmatprep.subr.mxu0 0.0
    %921 = vmatpush1.msra.mxu0 %v904
    %922 = vmatprep.subr.mxu0 0.0
    %923 = vmatpush1.msra.mxu0 %v905
    %924 = vmatprep.subr.mxu0 0.0
    %925 = vmatpush1.msra.mxu0 %v906
    %926 = vmatprep.subr.mxu0 0.0
    %927 = vmatpush1.msra.mxu0 %v907
    %928 = vmatprep.subr.mxu0 0.0
    %929 = vmatpush1.msra.mxu0 %v908
    %930 = vmatprep.subr.mxu0 0.0
    %931 = vmatpush1.msra.mxu0 %v909
    %932 = vmatprep.subr.mxu0 0.0
    %933 = vmatpush1.msra.mxu0 %v910
    %934 = vmatprep.subr.mxu0 0.0
    %935 = vmatpush1.msra.mxu0 %v911
    %936 = vmatprep.subr.mxu0 0.0
    %937 = vmatpush1.msra.mxu0 %v912
    %938 = vmatprep.subr.mxu0 0.0
    %939 = vmatpush1.msra.mxu0 %v913
    %940 = vmatprep.subr.mxu0 0.0
    %941 = vmatpush1.msra.mxu0 %v914
    %942 = vmatprep.subr.mxu0 0.0
    %943 = vmatpush1.msra.mxu0 %v915
    %944 = vmatprep.subr.mxu0 0.0
    %945 = vmatpush1.msra.mxu0 %v916
    %946 = vmatprep.subr.mxu0 0.0
    %947 = vmatpush1.msra.mxu0 %v917
    %948 = vmatprep.subr.mxu0 0.0
    %949 = vmatpush1.msra.mxu0 %v918
    %950 = vmatprep.subr.mxu0 0.0
    %951 = vmatpush1.msra.mxu0 %v919
    %952 = vmatprep.subr.mxu0 0.0
    %953 = vmatpush1.msra.mxu0 0.0
    %954 = vmatprep.subr.mxu0 0.0
    %955 = vmatpush1.msra.mxu0 0.0
    %956 = vmatprep.subr.mxu0 0.0
    %957 = vmatpush1.msra.mxu0 0.0
    %958 = vmatprep.subr.mxu0 0.0
    %959 = vmatpush1.msra.mxu0 0.0
    %960 = vmatprep.subr.mxu0 0.0
    %961 = vmatpush1.msra.mxu0 0.0
    %962 = vmatprep.subr.mxu0 0.0
    %963 = vmatpush1.msra.mxu0 0.0
    %964 = vmatprep.subr.mxu0 0.0
    %965 = vmatpush1.msra.mxu0 0.0
    %966 = vmatprep.subr.mxu0 0.0
    %967 = vmatpush1.msra.mxu0 0.0
    %968 = vmatprep.subr.mxu0 0.0
    %969 = vmatpush1.msra.mxu0 0.0
    %970 = vmatprep.subr.mxu0 0.0
    %971 = vmatpush1.msra.mxu0 0.0
    %972 = vmatprep.subr.mxu0 0.0
    %973 = vmatpush1.msra.mxu0 0.0
    %974 = vmatprep.subr.mxu0 0.0
    %975 = vmatpush1.msra.mxu0 0.0
    %976 = vmatprep.subr.mxu0 0.0
    %977 = vmatpush1.msra.mxu0 0.0
    %978 = vmatprep.subr.mxu0 0.0
    %979 = vmatpush1.msra.mxu0 0.0
    %980 = vmatprep.subr.mxu0 0.0
    %981 = vmatpush1.msra.mxu0 0.0
    %982 = vmatprep.subr.mxu0 0.0
    %983 = vmatpush1.msra.mxu0 0.0
    %984 = vmatprep.mubr.f32.mxu0 0.0
    %985 = vmatmul.mubr.f32.gmra.mrb[0].mxu0 %v903
    %v986 = vpop.f32.mrb[0].mxu0
    %v987 = vadd.f32 0.0, %v986
    %v988 = vpop.f32.mrb[0].mxu0
    %989 = vdwg.mxu0
    %v990 = vlaneseq
    %v991 = vshrl.u32 %v990, 7
    %v992 = vsub.s32 0, %v991
    %v993 = vrot.slane %v987, %v992
    %v994 = vsub.f32 %v895, %v993
    %v995 = vsub.f32 %v896, %v993
    %v996 = vmul.f32 %v994, %v994
    %v997 = vmul.f32 %v995, %v995
    %v998 = vadd.f32 %v996, %v997
    %v999 = vrot.slane %v998, 4
    %v1000 = vadd.f32 %v998, %v999
    %v1001 = vrot.slane %v1000, 2
    %v1002 = vadd.f32 %v1000, %v1001
    %v1003 = vrot.slane %v1002, 1
    %v1004 = vadd.f32 %v1002, %v1003
    %1005 = vmatprep.subr.mxu0 0.0
    %1006 = vmatpush1.msra.mxu0 %v904
    %1007 = vmatprep.subr.mxu0 0.0
    %1008 = vmatpush1.msra.mxu0 %v905
    %1009 = vmatprep.subr.mxu0 0.0
    %1010 = vmatpush1.msra.mxu0 %v906
    %1011 = vmatprep.subr.mxu0 0.0
    %1012 = vmatpush1.msra.mxu0 %v907
    %1013 = vmatprep.subr.mxu0 0.0
    %1014 = vmatpush1.msra.mxu0 %v908
    %1015 = vmatprep.subr.mxu0 0.0
    %1016 = vmatpush1.msra.mxu0 %v909
    %1017 = vmatprep.subr.mxu0 0.0
    %1018 = vmatpush1.msra.mxu0 %v910
    %1019 = vmatprep.subr.mxu0 0.0
    %1020 = vmatpush1.msra.mxu0 %v911
    %1021 = vmatprep.subr.mxu0 0.0
    %1022 = vmatpush1.msra.mxu0 %v912
    %1023 = vmatprep.subr.mxu0 0.0
    %1024 = vmatpush1.msra.mxu0 %v913
    %1025 = vmatprep.subr.mxu0 0.0
    %1026 = vmatpush1.msra.mxu0 %v914
    %1027 = vmatprep.subr.mxu0 0.0
    %1028 = vmatpush1.msra.mxu0 %v915
    %1029 = vmatprep.subr.mxu0 0.0
    %1030 = vmatpush1.msra.mxu0 %v916
    %1031 = vmatprep.subr.mxu0 0.0
    %1032 = vmatpush1.msra.mxu0 %v917
    %1033 = vmatprep.subr.mxu0 0.0
    %1034 = vmatpush1.msra.mxu0 %v918
    %1035 = vmatprep.subr.mxu0 0.0
    %1036 = vmatpush1.msra.mxu0 %v919
    %1037 = vmatprep.subr.mxu0 0.0
    %1038 = vmatpush1.msra.mxu0 0.0
    %1039 = vmatprep.subr.mxu0 0.0
    %1040 = vmatpush1.msra.mxu0 0.0
    %1041 = vmatprep.subr.mxu0 0.0
    %1042 = vmatpush1.msra.mxu0 0.0
    %1043 = vmatprep.subr.mxu0 0.0
    %1044 = vmatpush1.msra.mxu0 0.0
    %1045 = vmatprep.subr.mxu0 0.0
    %1046 = vmatpush1.msra.mxu0 0.0
    %1047 = vmatprep.subr.mxu0 0.0
    %1048 = vmatpush1.msra.mxu0 0.0
    %1049 = vmatprep.subr.mxu0 0.0
    %1050 = vmatpush1.msra.mxu0 0.0
    %1051 = vmatprep.subr.mxu0 0.0
    %1052 = vmatpush1.msra.mxu0 0.0
    %1053 = vmatprep.subr.mxu0 0.0
    %1054 = vmatpush1.msra.mxu0 0.0
    %1055 = vmatprep.subr.mxu0 0.0
    %1056 = vmatpush1.msra.mxu0 0.0
    %1057 = vmatprep.subr.mxu0 0.0
    %1058 = vmatpush1.msra.mxu0 0.0
    %1059 = vmatprep.subr.mxu0 0.0
    %1060 = vmatpush1.msra.mxu0 0.0
    %1061 = vmatprep.subr.mxu0 0.0
    %1062 = vmatpush1.msra.mxu0 0.0
    %1063 = vmatprep.subr.mxu0 0.0
    %1064 = vmatpush1.msra.mxu0 0.0
    %1065 = vmatprep.subr.mxu0 0.0
    %1066 = vmatpush1.msra.mxu0 0.0
    %1067 = vmatprep.subr.mxu0 0.0
    %1068 = vmatpush1.msra.mxu0 0.0
    %1069 = vmatprep.mubr.f32.mxu0 0.0
    %1070 = vmatmul.mubr.f32.gmra.mrb[0].mxu0 %v1004
    %v1071 = vpop.f32.mrb[0].mxu0
    %v1072 = vadd.f32 1e-05, %v1071
    %v1073 = vpop.f32.mrb[0].mxu0
    %1074 = vdwg.mxu0
    %v1075 = vrsqrt.pop %v1072
    %v1076 = vmul.f32 %v1075, %v43
    %v1077 = vlaneseq
    %v1078 = vshrl.u32 %v1077, 7
    %v1079 = vsub.s32 0, %v1078
    %v1080 = vrot.slane %v1076, %v1079
    %v1081 = vmul.f32 %v994, %v1080
    %v1082 = vmul.f32 %v995, %v1080
    %v1083 = vlaneseq
    %v1084 = vshrl.u32 %v1083, 7
    %v1085 = vsub.s32 0, %v1084
    %v1086 = vrot.slane %v44, %v1085
    %v1087 = vadd.f32 %v1081, %v1086
    %v1088 = vadd.f32 %v1082, %v1086
    %v1089 = vmax.f32 %v1087, 0.0
    %v1090 = vmax.f32 %v1088, 0.0
    %1091 = vst [vmem:[%s5] sm:$0xff] %v1089
    %1092 = vst [vmem:[%s5 + $0x8] sm:$0xff] %v1090
    // Predicated region
    $region26: #{forward.1} parent=1 // pred_check
      _
    $region27: #{forward.1} parent=1 // pred_check_branch
      %1094 = sbr.rel (0) target = $region29
    $region28: #{forward.1} parent=1 // pred_region
      _
    $region29: #{forward.1} parent=1 // pred_fallthru
      _
    // Predicated region
    $region30: #{forward.1} parent=1 // pred_check
      _
    $region31: #{forward.1} parent=1 // pred_check_branch
      %1096 = sbr.rel (0) target = $region33
    $region32: #{forward.1} parent=1 // pred_region
      _
    $region33: #{forward.1} parent=1 // pred_fallthru
      _
    %1097 = vsyncpa [#allocation4], 1

</llo_original>
